<compile_context>
chip_gen: v7x
topology: tpu7x:2x2x1
jax: 0.10.0
libtpu: 0.0.40
codegen_flags: <defaults>
</compile_context>

<pallas_src>
import jax
import jax.numpy as jnp
from jax.experimental import pallas as pl
from jax.experimental.pallas import tpu as pltpu

EPS = 1e-5  # torch.nn.LayerNorm default


# ---------------------------------------------------------------------------
# Fused Pallas kernel: LayerNorm over last axis, then Linear (MXU matmul)
# ---------------------------------------------------------------------------
def _prenorm_linear_kernel(x_ref, g_ref, b_ref, w_ref, bl_ref, o_ref):
    # LayerNorm (biased variance, like torch.nn.LayerNorm), stats in f32.
    x = x_ref[...].astype(jnp.float32)
    mean = jnp.mean(x, axis=-1, keepdims=True)
    centered = x - mean
    var = jnp.mean(centered * centered, axis=-1, keepdims=True)
    inv = jax.lax.rsqrt(var + EPS)
    normed = (centered * inv) * g_ref[...].astype(jnp.float32) \
             + b_ref[...].astype(jnp.float32)
    # Feed the normalized rows straight to the MXU (no HBM round trip).
    acc = jnp.dot(normed.astype(w_ref.dtype), w_ref[...],
                  preferred_element_type=jnp.float32)
    o_ref[...] = (acc + bl_ref[...].astype(jnp.float32)).astype(o_ref.dtype)


# ---------------------------------------------------------------------------
# Wrapper
# ---------------------------------------------------------------------------
def _round_up(v, m):
    return ((v + m - 1) // m) * m


def pre_norm_linear_pallas(x2d, gamma, beta, w, b_lin, *, tile_n=None, tile_dout=None):
    """Fused fn(LayerNorm(x)) with fn = Linear.

    x2d: (N, D), gamma/beta: (1, D), w: (D, Dout), b_lin: (1, Dout).
    """
    n, d = x2d.shape
    d_w, dout = w.shape
    assert d_w == d, "weight in-dim must match LayerNorm dim"

    # Row tile: multiple of 8 (f32) / 16 (bf16); big enough to amortize the
    # per-grid-step overhead, small enough to keep double-buffers in VMEM.
    row_mult = 16 if x2d.dtype == jnp.bfloat16 else 8
    if tile_n is None:
        tile_n = min(512, _round_up(n, row_mult))
    # Output-column tile: lane-dense (multiple of 128) when possible so stores
    # are unmasked; otherwise take the full (possibly <128) output dim.
    if tile_dout is None:
        tile_dout = min(dout, 1024) if dout % 128 == 0 else dout

    grid = (pl.cdiv(n, tile_n), pl.cdiv(dout, tile_dout))

    # Advisory cost estimate for XLA scheduling.
    itemsize = jnp.dtype(x2d.dtype).itemsize
    cost = pl.CostEstimate(
        flops=2 * n * d * dout + 8 * n * d,
        transcendentals=n,  # one rsqrt per row
        bytes_accessed=(n * d + d * dout + n * dout + 3 * d + dout) * itemsize,
    )

    # VMEM budget: double-buffered x / W-tile / out-tile + params, with
    # headroom; capped at 48 MiB so it also fits v7x's 64 MiB VMEM.
    vmem_bytes = 2 * (tile_n * d + d * tile_dout + tile_n * tile_dout
                      + 2 * d + tile_dout) * 4
    vmem_limit = int(min(max(2 * vmem_bytes, 16 * 1024 * 1024), 48 * 1024 * 1024))

    return pl.pallas_call(
        _prenorm_linear_kernel,
        out_shape=jax.ShapeDtypeStruct((n, dout), x2d.dtype),
        grid_spec=pl.GridSpec(
            grid=grid,
            in_specs=[
                pl.BlockSpec((tile_n, d), lambda i, j: (i, 0)),        # x rows
                pl.BlockSpec((1, d), lambda i, j: (0, 0)),             # gamma (resident)
                pl.BlockSpec((1, d), lambda i, j: (0, 0)),             # beta  (resident)
                pl.BlockSpec((d, tile_dout), lambda i, j: (0, j)),     # W columns
                pl.BlockSpec((1, tile_dout), lambda i, j: (0, j)),     # linear bias
            ],
            out_specs=pl.BlockSpec((tile_n, tile_dout), lambda i, j: (i, j)),
        ),
        compiler_params=pltpu.CompilerParams(
            dimension_semantics=("parallel", "parallel"),
            vmem_limit_bytes=vmem_limit,
        ),
        cost_estimate=cost,
    )(x2d, gamma, beta, w, b_lin)


def pre_norm(x, gamma, beta, w, b_lin):
    """PreNorm.forward with fn = Linear: fn(LayerNorm(x)). x: (batch, seq, dim)."""
    b, s, d = x.shape
    x2d = x.reshape(b * s, d)
    out = pre_norm_linear_pallas(x2d, gamma, beta, w, b_lin)
    return out.reshape(b, s, -1)


# ---------------------------------------------------------------------------
# Reference (plain JAX) for validation
# ---------------------------------------------------------------------------
def pre_norm_ref(x, gamma, beta, w, b_lin):
    mean = jnp.mean(x, axis=-1, keepdims=True)
    var = jnp.mean((x - mean) ** 2, axis=-1, keepdims=True)
    normed = (x - mean) * jax.lax.rsqrt(var + EPS) * gamma[0] + beta[0]
    return normed @ w + b_lin[0]


if __name__ == "__main__":
    key = jax.random.PRNGKey(0)
    batch, seq, dim = 2, 8, 32  # small shapes consistent with the module

    k_x, k_w, k_b, _, _ = jax.random.split(key, 5)
    x = jax.random.normal(k_x, (batch, seq, dim), dtype=jnp.float32)

    # LayerNorm params: torch default init is ones / zeros (deterministic).
    gamma = jnp.ones((1, dim), dtype=jnp.float32)
    beta = jnp.zeros((1, dim), dtype=jnp.float32)

    # fn := Linear(dim, dim), deterministic random init.
    w = jax.random.normal(k_w, (dim, dim), dtype=jnp.float32) * 0.02
    b_lin = jax.random.normal(k_b, (1, dim), dtype=jnp.float32) * 0.01

    out = pre_norm(x, gamma, beta, w, b_lin)
    out = jax.block_until_ready(out)

    ref = pre_norm_ref(x, gamma, beta, w, b_lin)
    assert out.shape == (batch, seq, dim)
    assert jnp.allclose(out, ref, atol=1e-4, rtol=1e-4), (
        f"max abs err = {jnp.max(jnp.abs(out - ref))}"
    )

    print("KERNEL_OK")
</pallas_src>

<mosaic_0001>
module attributes {stable_mosaic.version = 11 : i64} {
  func.func @_prenorm_linear_kernel(%arg0: i32, %arg1: i32, %arg2: memref<16x32xf32, #tpu.memory_space<vmem>>, %arg3: memref<1x32xf32, #tpu.memory_space<vmem>>, %arg4: memref<1x32xf32, #tpu.memory_space<vmem>>, %arg5: memref<32x32xf32, #tpu.memory_space<vmem>>, %arg6: memref<1x32xf32, #tpu.memory_space<vmem>>, %arg7: memref<16x32xf32, #tpu.memory_space<vmem>>) attributes {dimension_semantics = [#tpu.dimension_semantics<parallel>, #tpu.dimension_semantics<parallel>], iteration_bounds = array<i64: 1, 1>, scalar_prefetch = 0 : i64, scratch_operands = 0 : i64, tpu.core_type = #tpu.core_type<tc>, window_params = [{transform_indices = @transform_0, window_bounds = array<i64: 16, 32>}, {pipeline_mode = #tpu.pipeline_mode<synchronous>, transform_indices = @transform_1, window_bounds = array<i64: 1, 32>}, {pipeline_mode = #tpu.pipeline_mode<synchronous>, transform_indices = @transform_2, window_bounds = array<i64: 1, 32>}, {transform_indices = @transform_3, window_bounds = array<i64: 32, 32>}, {transform_indices = @transform_4, window_bounds = array<i64: 1, 32>}, {transform_indices = @transform_5, window_bounds = array<i64: 16, 32>}]} {
    %c0 = arith.constant 0 : index
    %c0_0 = arith.constant 0 : index
    %0 = vector.load %arg2[%c0, %c0_0] : memref<16x32xf32, #tpu.memory_space<vmem>>, vector<16x32xf32>
    %cst = arith.constant dense<0.000000e+00> : vector<16xf32>
    %1 = vector.multi_reduction <add>, %0, %cst [1] : vector<16x32xf32> to vector<16xf32>
    %2 = vector.shape_cast %1 : vector<16xf32> to vector<16x1xf32>
    %cst_1 = arith.constant 3.200000e+01 : f32
    %3 = vector.broadcast %cst_1 : f32 to vector<16x1xf32>
    %4 = arith.divf %2, %3 : vector<16x1xf32>
    %5 = vector.broadcast %4 : vector<16x1xf32> to vector<16x32xf32>
    %6 = arith.subf %0, %5 : vector<16x32xf32>
    %7 = arith.mulf %6, %6 : vector<16x32xf32>
    %cst_2 = arith.constant dense<0.000000e+00> : vector<16xf32>
    %8 = vector.multi_reduction <add>, %7, %cst_2 [1] : vector<16x32xf32> to vector<16xf32>
    %9 = vector.shape_cast %8 : vector<16xf32> to vector<16x1xf32>
    %cst_3 = arith.constant 3.200000e+01 : f32
    %10 = vector.broadcast %cst_3 : f32 to vector<16x1xf32>
    %11 = arith.divf %9, %10 : vector<16x1xf32>
    %cst_4 = arith.constant 9.99999974E-6 : f32
    %12 = vector.broadcast %cst_4 : f32 to vector<16x1xf32>
    %13 = arith.addf %11, %12 : vector<16x1xf32>
    %14 = math.rsqrt %13 : vector<16x1xf32>
    %15 = vector.broadcast %14 : vector<16x1xf32> to vector<16x32xf32>
    %16 = arith.mulf %6, %15 : vector<16x32xf32>
    %c0_5 = arith.constant 0 : index
    %c0_6 = arith.constant 0 : index
    %17 = vector.load %arg3[%c0_5, %c0_6] : memref<1x32xf32, #tpu.memory_space<vmem>>, vector<1x32xf32>
    %18 = vector.broadcast %17 : vector<1x32xf32> to vector<16x32xf32>
    %19 = arith.mulf %16, %18 : vector<16x32xf32>
    %c0_7 = arith.constant 0 : index
    %c0_8 = arith.constant 0 : index
    %20 = vector.load %arg4[%c0_7, %c0_8] : memref<1x32xf32, #tpu.memory_space<vmem>>, vector<1x32xf32>
    %21 = vector.broadcast %20 : vector<1x32xf32> to vector<16x32xf32>
    %22 = arith.addf %19, %21 : vector<16x32xf32>
    %c0_9 = arith.constant 0 : index
    %c0_10 = arith.constant 0 : index
    %23 = vector.load %arg5[%c0_9, %c0_10] : memref<32x32xf32, #tpu.memory_space<vmem>>, vector<32x32xf32>
    %cst_11 = arith.constant dense<0.000000e+00> : vector<16x32xf32>
    %24 = tpu.matmul %22, %23, %cst_11 {dimension_numbers = #tpu.dot_dimension_numbers<[1], [0], [0], [1], [0, 0, 1, 1], [], []>} : vector<16x32xf32>, vector<32x32xf32>, vector<16x32xf32> -> vector<16x32xf32>
    %c0_12 = arith.constant 0 : index
    %c0_13 = arith.constant 0 : index
    %25 = vector.load %arg6[%c0_12, %c0_13] : memref<1x32xf32, #tpu.memory_space<vmem>>, vector<1x32xf32>
    %26 = vector.broadcast %25 : vector<1x32xf32> to vector<16x32xf32>
    %27 = arith.addf %24, %26 : vector<16x32xf32>
    %c0_14 = arith.constant 0 : index
    %c0_15 = arith.constant 0 : index
    %28 = vector.load %arg7[%c0_14, %c0_15] : memref<16x32xf32, #tpu.memory_space<vmem>>, vector<16x32xf32>
    tpu.vector_store %arg7[%c0_14, %c0_15], %27 {strides = array<i32>} : memref<16x32xf32, #tpu.memory_space<vmem>>, vector<16x32xf32>,
    return
  }
  func.func @transform_0(%arg0: i32, %arg1: i32) -> (i32, i32) {
    %c0_i32 = arith.constant 0 : i32
    %c0_i32_0 = arith.constant 0 : i32
    return %arg0, %c0_i32 : i32, i32
  }
  func.func @transform_1(%arg0: i32, %arg1: i32) -> (i32, i32) {
    %c0_i32 = arith.constant 0 : i32
    %c0_i32_0 = arith.constant 0 : i32
    %c0_i32_1 = arith.constant 0 : i32
    return %c0_i32, %c0_i32_0 : i32, i32
  }
  func.func @transform_2(%arg0: i32, %arg1: i32) -> (i32, i32) {
    %c0_i32 = arith.constant 0 : i32
    %c0_i32_0 = arith.constant 0 : i32
    %c0_i32_1 = arith.constant 0 : i32
    return %c0_i32, %c0_i32_0 : i32, i32
  }
  func.func @transform_3(%arg0: i32, %arg1: i32) -> (i32, i32) {
    %c0_i32 = arith.constant 0 : i32
    %c0_i32_0 = arith.constant 0 : i32
    return %c0_i32, %arg1 : i32, i32
  }
  func.func @transform_4(%arg0: i32, %arg1: i32) -> (i32, i32) {
    %c0_i32 = arith.constant 0 : i32
    %c0_i32_0 = arith.constant 0 : i32
    return %c0_i32, %arg1 : i32, i32
  }
  func.func @transform_5(%arg0: i32, %arg1: i32) -> (i32, i32) {
    %c0_i32 = arith.constant 0 : i32
    return %arg0, %arg1 : i32, i32
  }
}

</mosaic_0001>

<llo_original>
// kernel: tpu_custom_call.1
$region0: #{tpu_custom_call.1}
  #allocation0 [shape = 'u32[]', space=smem, size = 0x4, offset = 0x4, fixed_abs, tag = 'smem constant byte address 0x4 - core index']
  #allocation1 [shape = 'u32[144,128]{1,0:T(1,128)}', space=vmem, size = 0x12000, scoped, tag = 'internal scratch']
  %s0 = inlined_call_operand.hbm [shape: f32[16,32], index: 0, kind: input, shape index: {}]
  %s1 = inlined_call_operand.vmem [shape: f32[1,32], index: 1, kind: input, shape index: {}]
  %s2 = inlined_call_operand.vmem [shape: f32[1,32], index: 2, kind: input, shape index: {}]
  %s3 = inlined_call_operand.hbm [shape: f32[32,32], index: 3, kind: input, shape index: {}]
  %s4 = inlined_call_operand.vmem [shape: f32[1,32], index: 4, kind: input, shape index: {}]
  %s5 = inlined_call_operand.hbm [shape: f32[16,32], index: 5, kind: output, shape index: {}]
  %s6 = sld [smem:[#allocation0]]
  $region38: #{tpu_custom_call.1} parent=0
    _
  %s8 = ssub.s32 1, %s6
  %s9 = scalar_select 0, %s8, %s6
  $region1: #{tpu_custom_call.1} parent=0
    #allocation2 [shape = 'u8[8192]{0}', space=vmem, size = 0x2000, scoped, tag = 'input window, operand 0, single buffered']
    #allocation3 [shape = 's32[1]{0}', space=sflag, size = 0x4, scoped, tag = 'scoped memory for tpu_custom_call.1']
    #allocation4 [shape = 's32[1]{0}', space=sflag, size = 0x4, scoped, tag = 'scoped memory for tpu_custom_call.1']
    #allocation5 [shape = 'u8[16384]{0}', space=vmem, size = 0x4000, scoped, tag = 'input window, operand 3, single buffered']
    #allocation6 [shape = 's32[1]{0}', space=sflag, size = 0x4, scoped, tag = 'scoped memory for tpu_custom_call.1']
    #allocation7 [shape = 'u8[8192]{0}', space=vmem, size = 0x2000, scoped, tag = 'output window, operand 0, single buffered']
    %10 = vsyncpa [#allocation3], 0
    %11 = vsyncpa [#allocation6], 0
    %12 = vsyncpa [#allocation4], 0
    // Predicated region
    $region2: #{tpu_custom_call.1} parent=1 // pred_check
      _
    $region3: #{tpu_custom_call.1} parent=1 // pred_check_branch
      %14 = sbr.rel (0) target = $region5
    $region4: #{tpu_custom_call.1} parent=1 // pred_region
      %s16 = ssub.s32 256, 256
      %17 = vsyncadd [#allocation3], %s16
      %s18 = sshll.u32 [#allocation2], 4
      %s19 = int_to_ptr.vmem [resolvable:$true] %s18
      %24 = dma.hbm_to_vmem [thread:$0]  %s0, 256, %s19, [#allocation3], 128, 128, 8
    $region5: #{tpu_custom_call.1} parent=1 // pred_fallthru
      _
    // Predicated region
    $region6: #{tpu_custom_call.1} parent=1 // pred_check
      _
    $region7: #{tpu_custom_call.1} parent=1 // pred_check_branch
      %26 = sbr.rel (0) target = $region9
    $region8: #{tpu_custom_call.1} parent=1 // pred_region
      _
    $region9: #{tpu_custom_call.1} parent=1 // pred_fallthru
      _
    // Predicated region
    $region10: #{tpu_custom_call.1} parent=1 // pred_check
      _
    $region11: #{tpu_custom_call.1} parent=1 // pred_check_branch
      %28 = sbr.rel (0) target = $region13
    $region12: #{tpu_custom_call.1} parent=1 // pred_region
      _
    $region13: #{tpu_custom_call.1} parent=1 // pred_fallthru
      _
    // Predicated region
    $region14: #{tpu_custom_call.1} parent=1 // pred_check
      _
    $region15: #{tpu_custom_call.1} parent=1 // pred_check_branch
      %30 = sbr.rel (0) target = $region17
    $region16: #{tpu_custom_call.1} parent=1 // pred_region
      %s32 = ssub.s32 512, 512
      %33 = vsyncadd [#allocation6], %s32
      %s34 = sshll.u32 [#allocation5], 4
      %s35 = int_to_ptr.vmem [resolvable:$true] %s34
      %40 = dma.hbm_to_vmem [thread:$0]  %s3, 512, %s35, [#allocation6], 128, 128, 8
    $region17: #{tpu_custom_call.1} parent=1 // pred_fallthru
      _
    // Predicated region
    $region18: #{tpu_custom_call.1} parent=1 // pred_check
      _
    $region19: #{tpu_custom_call.1} parent=1 // pred_check_branch
      %42 = sbr.rel (0) target = $region21
    $region20: #{tpu_custom_call.1} parent=1 // pred_region
      _
    $region21: #{tpu_custom_call.1} parent=1 // pred_fallthru
      _
    // Predicated region
    $region22: #{tpu_custom_call.1} parent=1 // pred_check
      _
    $region23: #{tpu_custom_call.1} parent=1 // pred_check_branch
      %44 = sbr.rel (0) target = $region25
    $region24: #{tpu_custom_call.1} parent=1 // pred_region
      %45 = dma.done [#allocation3], 256
    $region25: #{tpu_custom_call.1} parent=1 // pred_fallthru
      _
    // Predicated region
    $region26: #{tpu_custom_call.1} parent=1 // pred_check
      _
    $region27: #{tpu_custom_call.1} parent=1 // pred_check_branch
      %47 = sbr.rel (0) target = $region29
    $region28: #{tpu_custom_call.1} parent=1 // pred_region
      %48 = dma.done [#allocation6], 512
    $region29: #{tpu_custom_call.1} parent=1 // pred_fallthru
      _
    %v49 = vld [vmem:[#allocation2] sm:$0xff]
    %v50 = vld [vmem:[#allocation2 + $0x8] sm:$0xff]
    %vm51 = vcmask 261120
    %v52 = vsel %vm51, %v49, 0.0
    %53 = vadd.xlane.f32.xlu0 %v52
    %v54 = vpop.xlane.xlu0 %53
    %v55 = vsel %vm51, %v50, 0.0
    %56 = vadd.xlane.f32.xlu0 %v55
    %v57 = vpop.xlane.xlu0 %56
    %v58 = vrcp.pop 32.0
    %v59 = vmul.f32 %v54, %v58
    %v60 = vmul.f32 %v57, %v58
    %v61 = vsub.f32 %v49, %v59
    %v62 = vsub.f32 %v50, %v60
    %v63 = vmul.f32 %v61, %v61
    %v64 = vmul.f32 %v62, %v62
    %v65 = vsel %vm51, %v63, 0.0
    %66 = vadd.xlane.f32.xlu0 %v65
    %v67 = vpop.xlane.xlu0 %66
    %v68 = vsel %vm51, %v64, 0.0
    %69 = vadd.xlane.f32.xlu0 %v68
    %v70 = vpop.xlane.xlu0 %69
    %v71 = vmul.f32 %v67, %v58
    %v72 = vmul.f32 %v70, %v58
    %v73 = vadd.f32 %v71, 1e-05
    %v74 = vadd.f32 %v72, 1e-05
    %v75 = vrsqrt.pop %v73
    %v76 = vrsqrt.pop %v74
    %v77 = vmul.f32 %v61, %v75
    %v78 = vmul.f32 %v62, %v76
    %v79 = vld [vmem:[%s1] sm:$0x1]
    %v81 = vlaneseq
    %v82 = vshrl.u32 %v81, 7
    %v83 = vsub.s32 0, %v82
    %v84 = vrot.slane %v79, %v83
    %v86 = vmul.f32 %v77, %v84
    %v87 = vmul.f32 %v78, %v84
    %v88 = vld [vmem:[%s2] sm:$0x1]
    %v90 = vlaneseq
    %v91 = vshrl.u32 %v90, 7
    %v92 = vsub.s32 0, %v91
    %v93 = vrot.slane %v88, %v92
    %v95 = vadd.f32 %v86, %v93
    %v96 = vadd.f32 %v87, %v93
    %v97 = vld [vmem:[#allocation5] sm:$0xff]
    %v98 = vld [vmem:[#allocation5 + $0x8] sm:$0xff]
    %v99 = vld [vmem:[#allocation5 + $0x10] sm:$0xff]
    %v100 = vld [vmem:[#allocation5 + $0x18] sm:$0xff]
    %v101 = vld [vmem:[%s4] sm:$0x1]
    %v103 = vlaneseq
    %v104 = vshrl.u32 %v103, 7
    %v105 = vsub.s32 0, %v104
    %v106 = vrot.slane %v101, %v105
    %v109 = vsel %vm51, %v95, 0
    %v112 = vsel %vm51, %v96, 0
    %114 = vmatprep.subr.mxu0 0.0
    %115 = vmatpush1.msra.mxu0 %v97
    %116 = vmatprep.subr.mxu0 0.0
    %117 = vmatpush1.msra.mxu0 %v98
    %118 = vmatprep.subr.mxu0 0.0
    %119 = vmatpush1.msra.mxu0 %v99
    %120 = vmatprep.subr.mxu0 0.0
    %121 = vmatpush1.msra.mxu0 %v100
    %122 = vmatprep.subr.mxu0 0.0
    %123 = vmatpush1.msra.mxu0 0.0
    %124 = vmatprep.subr.mxu0 0.0
    %125 = vmatpush1.msra.mxu0 0.0
    %126 = vmatprep.subr.mxu0 0.0
    %127 = vmatpush1.msra.mxu0 0.0
    %128 = vmatprep.subr.mxu0 0.0
    %129 = vmatpush1.msra.mxu0 0.0
    %130 = vmatprep.subr.mxu0 0.0
    %131 = vmatpush1.msra.mxu0 0.0
    %132 = vmatprep.subr.mxu0 0.0
    %133 = vmatpush1.msra.mxu0 0.0
    %134 = vmatprep.subr.mxu0 0.0
    %135 = vmatpush1.msra.mxu0 0.0
    %136 = vmatprep.subr.mxu0 0.0
    %137 = vmatpush1.msra.mxu0 0.0
    %138 = vmatprep.subr.mxu0 0.0
    %139 = vmatpush1.msra.mxu0 0.0
    %140 = vmatprep.subr.mxu0 0.0
    %141 = vmatpush1.msra.mxu0 0.0
    %142 = vmatprep.subr.mxu0 0.0
    %143 = vmatpush1.msra.mxu0 0.0
    %144 = vmatprep.subr.mxu0 0.0
    %145 = vmatpush1.msra.mxu0 0.0
    %146 = vmatprep.subr.mxu0 0.0
    %147 = vmatpush1.msra.mxu0 0.0
    %148 = vmatprep.subr.mxu0 0.0
    %149 = vmatpush1.msra.mxu0 0.0
    %150 = vmatprep.subr.mxu0 0.0
    %151 = vmatpush1.msra.mxu0 0.0
    %152 = vmatprep.subr.mxu0 0.0
    %153 = vmatpush1.msra.mxu0 0.0
    %154 = vmatprep.subr.mxu0 0.0
    %155 = vmatpush1.msra.mxu0 0.0
    %156 = vmatprep.subr.mxu0 0.0
    %157 = vmatpush1.msra.mxu0 0.0
    %158 = vmatprep.subr.mxu0 0.0
    %159 = vmatpush1.msra.mxu0 0.0
    %160 = vmatprep.subr.mxu0 0.0
    %161 = vmatpush1.msra.mxu0 0.0
    %162 = vmatprep.subr.mxu0 0.0
    %163 = vmatpush1.msra.mxu0 0.0
    %164 = vmatprep.subr.mxu0 0.0
    %165 = vmatpush1.msra.mxu0 0.0
    %166 = vmatprep.subr.mxu0 0.0
    %167 = vmatpush1.msra.mxu0 0.0
    %168 = vmatprep.subr.mxu0 0.0
    %169 = vmatpush1.msra.mxu0 0.0
    %170 = vmatprep.subr.mxu0 0.0
    %171 = vmatpush1.msra.mxu0 0.0
    %172 = vmatprep.subr.mxu0 0.0
    %173 = vmatpush1.msra.mxu0 0.0
    %174 = vmatprep.subr.mxu0 0.0
    %175 = vmatpush1.msra.mxu0 0.0
    %176 = vmatprep.subr.mxu0 0.0
    %177 = vmatpush1.msra.mxu0 0.0
    %178 = vmatprep.mubr.f32.mxu0 0.0
    %179 = vmatmul.mubr.f32.gmra.mrb[0].mxu0 %v109
    %v180 = vpop.f32.mrb[0].mxu0
    %v181 = vadd.f32 %v106, %v180
    %v182 = vpop.f32.mrb[0].mxu0
    %183 = vmatprep.mubr.f32.mxu0 0.0
    %184 = vmatmul.mubr.f32.gmra.mrb[0].mxu0 %v112
    %v185 = vpop.f32.mrb[0].mxu0
    %v186 = vadd.f32 %v106, %v185
    %v187 = vpop.f32.mrb[0].mxu0
    %188 = vdwg.mxu0
    %189 = vst.msk [vmem:[#allocation7] sm:$0xff] %vm51, %v181
    %190 = vst.msk [vmem:[#allocation7 + $0x8] sm:$0xff] %vm51, %v186
    // Predicated region
    $region30: #{tpu_custom_call.1} parent=1 // pred_check
      _
    $region31: #{tpu_custom_call.1} parent=1 // pred_check_branch
      %192 = sbr.rel (0) target = $region33
    $region32: #{tpu_custom_call.1} parent=1 // pred_region
      %s194 = ssub.s32 256, 256
      %195 = vsyncadd [#allocation4], %s194
      %s196 = sshll.u32 [#allocation7], 4
      %s197 = int_to_ptr.vmem [resolvable:$true] %s196
      %202 = dma.vmem_to_hbm [thread:$0]  %s197, 256, %s5, [#allocation4], 128, 128, 8
    $region33: #{tpu_custom_call.1} parent=1 // pred_fallthru
      _
    // Predicated region
    $region34: #{tpu_custom_call.1} parent=1 // pred_check
      _
    $region35: #{tpu_custom_call.1} parent=1 // pred_check_branch
      %204 = sbr.rel (0) target = $region37
    $region36: #{tpu_custom_call.1} parent=1 // pred_region
      %205 = dma.done [#allocation4], 256
    $region37: #{tpu_custom_call.1} parent=1 // pred_fallthru
      _
    %206 = vsyncpa [#allocation3], 1
    %207 = vsyncpa [#allocation6], 1
    %208 = vsyncpa [#allocation4], 1

</llo_original>
